<compile_context>
chip_gen: v5e
topology: v5e:2x2
jax: 0.10.0
libtpu: 0.0.40
codegen_flags: <defaults>
</compile_context>

<pallas_src>
import functools
import math

import jax
import jax.numpy as jnp
from jax.experimental import pallas as pl
from jax.experimental.pallas import tpu as pltpu


# ---------------------------------------------------------------------------
# helpers
# ---------------------------------------------------------------------------
def _choose_tile(n, target):
    """Largest tile <= target that divides n (keeps BlockSpecs legal)."""
    t = min(target, n)
    while n % t:
        t -= 1
    return t


# ---------------------------------------------------------------------------
# Linear:  y = x @ W + b     (W stored as (in, out), i.e. nn.Linear.weight.T)
# ---------------------------------------------------------------------------
def _linear_kernel(x_ref, w_ref, b_ref, o_ref):
    # MXU operands in native dtype; f32 accumulation via preferred_element_type.
    y = jnp.dot(x_ref[...], w_ref[...], preferred_element_type=jnp.float32)
    y = y + b_ref[...].astype(jnp.float32)     # bias add in f32
    o_ref[...] = y.astype(o_ref.dtype)


def linear(x2d, w, b, *, tm=256):
    M, K = x2d.shape
    K2, N = w.shape
    assert K == K2
    tm = _choose_tile(M, tm)

    b2d = b.reshape(1, N)
    itemsize = jnp.dtype(x2d.dtype).itemsize
    cost = pl.CostEstimate(
        flops=2 * M * K * N,
        transcendentals=0,
        bytes_accessed=(M * K + K * N + N + M * N) * itemsize,
    )

    return pl.pallas_call(
        _linear_kernel,
        out_shape=jax.ShapeDtypeStruct((M, N), x2d.dtype),
        grid_spec=pltpu.PrefetchScalarGridSpec(
            num_scalar_prefetch=0,
            grid=(M // tm,),
            in_specs=[
                pl.BlockSpec((tm, K), lambda i: (i, 0)),   # x rows
                pl.BlockSpec((K, N), lambda i: (0, 0)),    # full weight (constant idx)
                pl.BlockSpec((1, N), lambda i: (0, 0)),    # bias
            ],
            out_specs=pl.BlockSpec((tm, N), lambda i: (i, 0)),
        ),
        compiler_params=pltpu.CompilerParams(
            dimension_semantics=("parallel",),
            vmem_limit_bytes=64 * 1024 * 1024,
        ),
        cost_estimate=cost,
    )(x2d, w, b2d)


# ---------------------------------------------------------------------------
# Causal flash attention (online softmax), grid = (B*H, q_tiles, kv_tiles)
# ---------------------------------------------------------------------------
def _flash_attn_kernel(q_ref, k_ref, v_ref, o_ref, m_sc, l_sc, acc_sc,
                       *, scale, tq, tk):
    qi = pl.program_id(1)
    ki = pl.program_id(2)

    @pl.when(ki == 0)
    def _init():
        m_sc[...] = jnp.full_like(m_sc, -1e30)
        l_sc[...] = jnp.zeros_like(l_sc)
        acc_sc[...] = jnp.zeros_like(acc_sc)

    # Skip kv blocks that lie entirely above the causal diagonal.
    @pl.when(ki * tk <= qi * tq + (tq - 1))
    def _compute():
        q = q_ref[...]                       # (tq, D) native dtype
        k = k_ref[...]                       # (tk, D)
        v = v_ref[...]                       # (tk, D)

        # scores = q @ k^T, accumulate in f32 on the MXU, then scale.
        s = jax.lax.dot_general(
            q, k, (((1,), (1,)), ((), ())),
            preferred_element_type=jnp.float32) * scale       # (tq, tk)

        # causal mask (finite large-negative so exp underflows cleanly to 0)
        q_idx = qi * tq + jax.lax.broadcasted_iota(jnp.int32, (tq, tk), 0)
        k_idx = ki * tk + jax.lax.broadcasted_iota(jnp.int32, (tq, tk), 1)
        s = jnp.where(k_idx <= q_idx, s, -1e30)

        m_prev = m_sc[...]                                    # (tq, 1)
        m_new = jnp.maximum(m_prev, s.max(axis=-1, keepdims=True))
        alpha = jnp.exp(m_prev - m_new)
        p = jnp.exp(s - m_new)                                # (tq, tk) f32

        l_sc[...] = alpha * l_sc[...] + p.sum(axis=-1, keepdims=True)
        acc_sc[...] = alpha * acc_sc[...] + jnp.dot(
            p.astype(v.dtype), v, preferred_element_type=jnp.float32)
        m_sc[...] = m_new

    @pl.when(ki == pl.num_programs(2) - 1)
    def _finalize():
        # Exact divide for tight numerics; use pl.reciprocal(l, approx=True)
        # for bf16 production runs if the EUP slot matters.
        o_ref[...] = (acc_sc[...] / l_sc[...]).astype(o_ref.dtype)


def flash_causal_attention(q, k, v, *, tq=128, tk=128):
    """q, k, v: (B*H, T, D) -> (B*H, T, D), causal, scale = 1/sqrt(D)."""
    BH, T, D = q.shape
    tq = _choose_tile(T, tq)
    tk = _choose_tile(T, tk)
    scale = 1.0 / math.sqrt(D)

    kernel = functools.partial(_flash_attn_kernel, scale=scale, tq=tq, tk=tk)

    itemsize = jnp.dtype(q.dtype).itemsize
    cost = pl.CostEstimate(
        flops=4 * BH * T * T * D,          # QK^T + PV (upper bound, pre-causal)
        transcendentals=BH * T * T,        # exp
        bytes_accessed=4 * BH * T * D * itemsize,
    )

    return pl.pallas_call(
        kernel,
        out_shape=jax.ShapeDtypeStruct((BH, T, D), q.dtype),
        grid_spec=pltpu.PrefetchScalarGridSpec(
            num_scalar_prefetch=0,
            grid=(BH, T // tq, T // tk),
            in_specs=[
                pl.BlockSpec((None, tq, D), lambda bh, qi, ki: (bh, qi, 0)),
                pl.BlockSpec((None, tk, D), lambda bh, qi, ki: (bh, ki, 0)),
                pl.BlockSpec((None, tk, D), lambda bh, qi, ki: (bh, ki, 0)),
            ],
            out_specs=pl.BlockSpec((None, tq, D), lambda bh, qi, ki: (bh, qi, 0)),
            scratch_shapes=[
                pltpu.VMEM((tq, 1), jnp.float32),   # running max m
                pltpu.VMEM((tq, 1), jnp.float32),   # running denom l
                pltpu.VMEM((tq, D), jnp.float32),   # output accumulator
            ],
        ),
        compiler_params=pltpu.CompilerParams(
            dimension_semantics=("parallel", "parallel", "arbitrary"),
            vmem_limit_bytes=64 * 1024 * 1024,
        ),
        cost_estimate=cost,
    )(q, k, v)


# ---------------------------------------------------------------------------
# Full CausalSelfAttention forward
# ---------------------------------------------------------------------------
def causal_self_attention(x, w_attn, b_attn, w_proj, b_proj, *, n_head,
                          tm=256, tq=128, tk=128):
    """x: (B, T, C). w_attn: (C, 3C), b_attn: (3C,), w_proj: (C, C), b_proj: (C,)."""
    B, T, C = x.shape
    assert C % n_head == 0
    D = C // n_head
    M = B * T

    # qkv projection (c_attn)
    qkv = linear(x.reshape(M, C), w_attn, b_attn, tm=tm)        # (M, 3C)

    # split heads: channel layout is [3, n_head, D] (matches torch split+view)
    qkv = qkv.reshape(B, T, 3, n_head, D)
    q = qkv[:, :, 0].transpose(0, 2, 1, 3).reshape(B * n_head, T, D)
    k = qkv[:, :, 1].transpose(0, 2, 1, 3).reshape(B * n_head, T, D)
    v = qkv[:, :, 2].transpose(0, 2, 1, 3).reshape(B * n_head, T, D)

    # causal scaled-dot-product attention
    y = flash_causal_attention(q, k, v, tq=tq, tk=tk)           # (B*H, T, D)

    # merge heads back to (M, C)
    y = y.reshape(B, n_head, T, D).transpose(0, 2, 1, 3).reshape(M, C)

    # output projection (c_proj)
    out = linear(y, w_proj, b_proj, tm=tm)                      # (M, C)
    return out.reshape(B, T, C)


# ---------------------------------------------------------------------------
# Pure-JAX reference
# ---------------------------------------------------------------------------
def attention_reference(x, w_attn, b_attn, w_proj, b_proj, n_head):
    B, T, C = x.shape
    D = C // n_head
    qkv = jnp.einsum("btc,cn->btn", x, w_attn) + b_attn
    q, k, v = jnp.split(qkv, 3, axis=-1)
    q = q.reshape(B, T, n_head, D).transpose(0, 2, 1, 3)
    k = k.reshape(B, T, n_head, D).transpose(0, 2, 1, 3)
    v = v.reshape(B, T, n_head, D).transpose(0, 2, 1, 3)
    s = jnp.einsum("bhqd,bhkd->bhqk", q, k) / math.sqrt(D)
    mask = jnp.tril(jnp.ones((T, T), dtype=bool))
    s = jnp.where(mask, s, -jnp.inf)
    p = jax.nn.softmax(s, axis=-1)
    y = jnp.einsum("bhqk,bhkd->bhqd", p, v)
    y = y.transpose(0, 2, 1, 3).reshape(B, T, C)
    return jnp.einsum("btc,cn->btn", y, w_proj) + b_proj


if __name__ == "__main__":
    # Small GPT-2-style config: n_embd=32, n_head=4 (head_dim=8), batch=2, seq=8.
    # NOTE: production configs should use C (and head_dim) multiples of 128 for
    # lane-dense stores; the tiny demo C=32 uses full-extent blocks instead.
    B, T, C, n_head = 2, 8, 32, 4

    key = jax.random.PRNGKey(0)
    kx, k1, k2, k3, k4 = jax.random.split(key, 5)

    x = jax.random.normal(kx, (B, T, C), dtype=jnp.float32)
    # nn.Linear-style weights stored as (in, out) (= torch .weight transposed).
    w_attn = jax.random.normal(k1, (C, 3 * C), dtype=jnp.float32) * 0.02
    b_attn = jax.random.normal(k2, (3 * C,), dtype=jnp.float32) * 0.02
    w_proj = jax.random.normal(k3, (C, C), dtype=jnp.float32) * 0.02
    b_proj = jax.random.normal(k4, (C,), dtype=jnp.float32) * 0.02

    out = causal_self_attention(x, w_attn, b_attn, w_proj, b_proj, n_head=n_head)
    out = jax.block_until_ready(out)

    ref = attention_reference(x, w_attn, b_attn, w_proj, b_proj, n_head)
    assert out.shape == (B, T, C)
    assert jnp.allclose(out, ref, atol=1e-4, rtol=1e-4), (
        f"mismatch vs reference, max abs diff {jnp.max(jnp.abs(out - ref))}")

    print("KERNEL_OK")
</pallas_src>

<mosaic_0001>
module attributes {stable_mosaic.version = 11 : i64} {
  func.func @_linear_kernel(%arg0: i32, %arg1: memref<16x32xf32, #tpu.memory_space<vmem>>, %arg2: memref<32x96xf32, #tpu.memory_space<vmem>>, %arg3: memref<1x96xf32, #tpu.memory_space<vmem>>, %arg4: memref<16x96xf32, #tpu.memory_space<vmem>>) attributes {dimension_semantics = [#tpu.dimension_semantics<parallel>], iteration_bounds = array<i64: 1>, scalar_prefetch = 0 : i64, scratch_operands = 0 : i64, tpu.core_type = #tpu.core_type<tc>, window_params = [{transform_indices = @transform_0, window_bounds = array<i64: 16, 32>}, {pipeline_mode = #tpu.pipeline_mode<synchronous>, transform_indices = @transform_1, window_bounds = array<i64: 32, 96>}, {pipeline_mode = #tpu.pipeline_mode<synchronous>, transform_indices = @transform_2, window_bounds = array<i64: 1, 96>}, {transform_indices = @transform_3, window_bounds = array<i64: 16, 96>}]} {
    %c0 = arith.constant 0 : index
    %c0_0 = arith.constant 0 : index
    %0 = vector.load %arg1[%c0, %c0_0] : memref<16x32xf32, #tpu.memory_space<vmem>>, vector<16x32xf32>
    %c0_1 = arith.constant 0 : index
    %c0_2 = arith.constant 0 : index
    %1 = vector.load %arg2[%c0_1, %c0_2] : memref<32x96xf32, #tpu.memory_space<vmem>>, vector<32x96xf32>
    %cst = arith.constant dense<0.000000e+00> : vector<16x96xf32>
    %2 = tpu.matmul %0, %1, %cst {dimension_numbers = #tpu.dot_dimension_numbers<[1], [0], [0], [1], [0, 0, 1, 1], [], []>} : vector<16x32xf32>, vector<32x96xf32>, vector<16x96xf32> -> vector<16x96xf32>
    %c0_3 = arith.constant 0 : index
    %c0_4 = arith.constant 0 : index
    %3 = vector.load %arg3[%c0_3, %c0_4] : memref<1x96xf32, #tpu.memory_space<vmem>>, vector<1x96xf32>
    %4 = vector.broadcast %3 : vector<1x96xf32> to vector<16x96xf32>
    %5 = arith.addf %2, %4 : vector<16x96xf32>
    %c0_5 = arith.constant 0 : index
    %c0_6 = arith.constant 0 : index
    %6 = vector.load %arg4[%c0_5, %c0_6] : memref<16x96xf32, #tpu.memory_space<vmem>>, vector<16x96xf32>
    tpu.vector_store %arg4[%c0_5, %c0_6], %5 {strides = array<i32>} : memref<16x96xf32, #tpu.memory_space<vmem>>, vector<16x96xf32>,
    return
  }
  func.func @transform_0(%arg0: i32) -> (i32, i32) {
    %c0_i32 = arith.constant 0 : i32
    %c0_i32_0 = arith.constant 0 : i32
    return %arg0, %c0_i32 : i32, i32
  }
  func.func @transform_1(%arg0: i32) -> (i32, i32) {
    %c0_i32 = arith.constant 0 : i32
    %c0_i32_0 = arith.constant 0 : i32
    %c0_i32_1 = arith.constant 0 : i32
    return %c0_i32, %c0_i32_0 : i32, i32
  }
  func.func @transform_2(%arg0: i32) -> (i32, i32) {
    %c0_i32 = arith.constant 0 : i32
    %c0_i32_0 = arith.constant 0 : i32
    %c0_i32_1 = arith.constant 0 : i32
    return %c0_i32, %c0_i32_0 : i32, i32
  }
  func.func @transform_3(%arg0: i32) -> (i32, i32) {
    %c0_i32 = arith.constant 0 : i32
    %c0_i32_0 = arith.constant 0 : i32
    return %arg0, %c0_i32 : i32, i32
  }
}

</mosaic_0001>

<llo_original>
// kernel: tpu_custom_call.1
$region0: #{tpu_custom_call.1}
  #allocation0 [shape = 'u32[]', space=smem, size = 0x4, offset = 0x4, fixed_abs, tag = 'smem constant byte address 0x4 - core index']
  #allocation1 [shape = 'u32[72,128]{1,0:T(1,128)}', space=vmem, size = 0x9000, scoped, tag = 'internal scratch']
  %s0 = inlined_call_operand.hbm [shape: f32[16,32], index: 0, kind: input, shape index: {}]
  %s1 = inlined_call_operand.hbm [shape: f32[32,96], index: 1, kind: input, shape index: {}]
  %s2 = inlined_call_operand.vmem [shape: f32[1,96], index: 2, kind: input, shape index: {}]
  %s3 = inlined_call_operand.hbm [shape: f32[16,96], index: 3, kind: output, shape index: {}]
  %s4 = sld [smem:[#allocation0]]
  $region30: #{tpu_custom_call.1} parent=0
    _
  %s6 = ssub.s32 1, %s4
  %s7 = scalar_select 0, %s6, %s4
  $region1: #{tpu_custom_call.1} parent=0
    #allocation2 [shape = 'u8[8192]{0}', space=vmem, size = 0x2000, scoped, tag = 'input window, operand 0, single buffered']
    #allocation3 [shape = 's32[1]{0}', space=sflag, size = 0x4, scoped, tag = 'scoped memory for tpu_custom_call.1']
    #allocation4 [shape = 's32[1]{0}', space=sflag, size = 0x4, scoped, tag = 'scoped memory for tpu_custom_call.1']
    #allocation5 [shape = 'u8[16384]{0}', space=vmem, size = 0x4000, scoped, tag = 'input window, operand 1, single buffered']
    #allocation6 [shape = 's32[1]{0}', space=sflag, size = 0x4, scoped, tag = 'scoped memory for tpu_custom_call.1']
    #allocation7 [shape = 'u8[8192]{0}', space=vmem, size = 0x2000, scoped, tag = 'output window, operand 0, single buffered']
    %8 = vsyncpa [#allocation3], 0
    %9 = vsyncpa [#allocation6], 0
    %10 = vsyncpa [#allocation4], 0
    // Predicated region
    $region2: #{tpu_custom_call.1} parent=1 // pred_check
      _
    $region3: #{tpu_custom_call.1} parent=1 // pred_check_branch
      %12 = sbr.rel (0) target = $region5
    $region4: #{tpu_custom_call.1} parent=1 // pred_region
      %14 = vsyncadd [#allocation3], 0
      %s15 = sshll.u32 %s0, 4
      %s16 = int_to_ptr.hbm [resolvable:$true] %s15
      %s17 = sshll.u32 [#allocation2], 4
      %s18 = int_to_ptr.vmem [resolvable:$true] %s17
      %23 = dma.hbm_to_vmem [thread:$0]  %s16, 256, %s18, [#allocation3], 128, 128, 8
    $region5: #{tpu_custom_call.1} parent=1 // pred_fallthru
      _
    // Predicated region
    $region6: #{tpu_custom_call.1} parent=1 // pred_check
      _
    $region7: #{tpu_custom_call.1} parent=1 // pred_check_branch
      %25 = sbr.rel (0) target = $region9
    $region8: #{tpu_custom_call.1} parent=1 // pred_region
      %27 = vsyncadd [#allocation6], 0
      %s28 = sshll.u32 %s1, 4
      %s29 = int_to_ptr.hbm [resolvable:$true] %s28
      %s30 = sshll.u32 [#allocation5], 4
      %s31 = int_to_ptr.vmem [resolvable:$true] %s30
      %36 = dma.hbm_to_vmem [thread:$0]  %s29, 512, %s31, [#allocation6], 128, 128, 8
    $region9: #{tpu_custom_call.1} parent=1 // pred_fallthru
      _
    // Predicated region
    $region10: #{tpu_custom_call.1} parent=1 // pred_check
      _
    $region11: #{tpu_custom_call.1} parent=1 // pred_check_branch
      %38 = sbr.rel (0) target = $region13
    $region12: #{tpu_custom_call.1} parent=1 // pred_region
      _
    $region13: #{tpu_custom_call.1} parent=1 // pred_fallthru
      _
    // Predicated region
    $region14: #{tpu_custom_call.1} parent=1 // pred_check
      _
    $region15: #{tpu_custom_call.1} parent=1 // pred_check_branch
      %40 = sbr.rel (0) target = $region17
    $region16: #{tpu_custom_call.1} parent=1 // pred_region
      %42 = dma.done [#allocation3], 256
    $region17: #{tpu_custom_call.1} parent=1 // pred_fallthru
      _
    // Predicated region
    $region18: #{tpu_custom_call.1} parent=1 // pred_check
      _
    $region19: #{tpu_custom_call.1} parent=1 // pred_check_branch
      %44 = sbr.rel (0) target = $region21
    $region20: #{tpu_custom_call.1} parent=1 // pred_region
      %46 = dma.done [#allocation6], 512
    $region21: #{tpu_custom_call.1} parent=1 // pred_fallthru
      _
    %v47 = vld [vmem:[#allocation2] sm:$0xff]
    %v48 = vld [vmem:[#allocation2 + $0x8] sm:$0xff]
    %v49 = vld [vmem:[#allocation5] sm:$0xff]
    %v50 = vld [vmem:[#allocation5 + $0x8] sm:$0xff]
    %v51 = vld [vmem:[#allocation5 + $0x10] sm:$0xff]
    %v52 = vld [vmem:[#allocation5 + $0x18] sm:$0xff]
    %v53 = vld [vmem:[%s2] sm:$0x1]
    %v55 = vperm.slane %v53, 0
    %vm57 = vcmask 261120
    %v59 = vsel %vm57, %v47, 0
    %v62 = vsel %vm57, %v48, 0
    %64 = vmatpush.msra.mxu0 0.0
    %65 = vmatpush.msra.mxu0 0.0
    %66 = vmatpush.msra.mxu0 0.0
    %67 = vmatpush.msra.mxu0 0.0
    %68 = vmatpush.msra.mxu0 0.0
    %69 = vmatpush.msra.mxu0 0.0
    %70 = vmatpush.msra.mxu0 0.0
    %71 = vmatpush.msra.mxu0 0.0
    %72 = vmatpush.msra.mxu0 0.0
    %73 = vmatpush.msra.mxu0 0.0
    %74 = vmatpush.msra.mxu0 0.0
    %75 = vmatpush.msra.mxu0 0.0
    %76 = vmatpush.msra.mxu0 %v52
    %77 = vmatpush.msra.mxu0 %v51
    %78 = vmatpush.msra.mxu0 %v50
    %79 = vmatpush.msra.mxu0 %v49
    %80 = vmatmul.f32.gmra.mxu0 %v59
    %v81 = vpop.f32.mrf.mxu0
    %v82 = vadd.f32 %v55, %v81
    %83 = vmatmul.f32.gmra.mxu0 %v62
    %v84 = vpop.f32.mrf.mxu0
    %v85 = vadd.f32 %v55, %v84
    %86 = vdwg.mxu0
    %vm87 = vcmask 785408
    %88 = vst.msk [vmem:[#allocation7] sm:$0xff] %vm87, %v82
    %89 = vst.msk [vmem:[#allocation7 + $0x8] sm:$0xff] %vm87, %v85
    // Predicated region
    $region22: #{tpu_custom_call.1} parent=1 // pred_check
      _
    $region23: #{tpu_custom_call.1} parent=1 // pred_check_branch
      %91 = sbr.rel (0) target = $region25
    $region24: #{tpu_custom_call.1} parent=1 // pred_region
      %93 = vsyncadd [#allocation4], 0
      %s94 = sshll.u32 [#allocation7], 4
      %s95 = int_to_ptr.vmem [resolvable:$true] %s94
      %s96 = sshll.u32 %s3, 4
      %s97 = int_to_ptr.hbm [resolvable:$true] %s96
      %102 = dma.vmem_to_hbm [thread:$0]  %s95, 256, %s97, [#allocation4], 128, 128, 8
    $region25: #{tpu_custom_call.1} parent=1 // pred_fallthru
      _
    // Predicated region
    $region26: #{tpu_custom_call.1} parent=1 // pred_check
      _
    $region27: #{tpu_custom_call.1} parent=1 // pred_check_branch
      %104 = sbr.rel (0) target = $region29
    $region28: #{tpu_custom_call.1} parent=1 // pred_region
      %106 = dma.done [#allocation4], 256
    $region29: #{tpu_custom_call.1} parent=1 // pred_fallthru
      _
    %107 = vsyncpa [#allocation3], 1
    %108 = vsyncpa [#allocation6], 1
    %109 = vsyncpa [#allocation4], 1

</llo_original>
